<compile_context>
chip_gen: v6e
topology: v6e:2x2x1
jax: 0.10.0
libtpu: 0.0.40
codegen_flags: <defaults>
</compile_context>

<pallas_src>
import jax
import jax.numpy as jnp
from jax.experimental import pallas as pl
from jax.experimental.pallas import tpu as pltpu


def masked_attention_kernel(x_ref, w_ref, b_ref, lens_ref, o_ref):
    # x_ref:    (Bb, S, C) f32     w_ref: (1, C) f32 (fused W_u @ W_w)
    # b_ref:    (1, 1)  f32        lens_ref: (Bb, 1) i32
    # o_ref:    (Bb, S) f32
    x = x_ref[...]                                            # (Bb, S, C)
    w = w_ref[...]                                            # (1, C)

    # Fused affine: vu[b, s] = sum_c x[b, s, c] * w[c] + b   (VPU mul + XLU reduce)
    vu = jnp.sum(x * w[None, :, :], axis=-1) + b_ref[...]     # (Bb, S)

    # Sequence mask: positions >= lens get a large finite negative instead of
    # -inf so a fully-masked row yields a uniform distribution, not NaN.
    lens = lens_ref[...]                                      # (Bb, 1)
    ids = jax.lax.broadcasted_iota(jnp.int32, vu.shape, 1)    # (Bb, S)
    vu = jnp.where(ids < lens, vu, jnp.float32(-1e30))

    # Softmax over the sequence axis.
    m = jnp.max(vu, axis=-1, keepdims=True)
    e = jnp.exp(vu - m)
    o_ref[...] = e / jnp.sum(e, axis=-1, keepdims=True)


def masked_attention(x, lens, w_omega_w, w_omega_b, u_omega_w, u_omega_b):
    """x: (B, S, code_num) f32, lens: (B,) int. Returns (B, S) f32 scores."""
    x = jnp.asarray(x, jnp.float32)
    B, S, C = x.shape
    A = w_omega_w.shape[0]

    w_w = jnp.asarray(w_omega_w, jnp.float32)                 # (A, C)
    b_w = jnp.asarray(w_omega_b, jnp.float32).reshape(A)      # (A,)
    w_u = jnp.asarray(u_omega_w, jnp.float32).reshape(1, A)   # (1, A)
    b_u = jnp.asarray(u_omega_b, jnp.float32).reshape(())     # ()

    # Fuse the two Linear layers (valid: no activation between them).
    w_comb = w_u @ w_w                                        # (1, C)
    b_comb = (jnp.sum(w_u * b_w) + b_u).reshape(1, 1)         # (1, 1)

    # ---- batch tiling ------------------------------------------------------
    lane, sub = 128, 8
    c_pad = -(-C // lane) * lane                              # lane-padded C
    s_pad = -(-S // sub) * sub                                # sublane-padded S
    row_bytes = s_pad * c_pad * 4                             # f32 per batch row
    x_buf_budget = 8 * 1024 * 1024                            # per x buffer; 2x double-buffered
    bb = max(1, x_buf_budget // row_bytes)
    bb = max(sub, (bb // sub) * sub)                          # multiple of 8 sublanes
    bb = min(bb, -(-B // sub) * sub)                          # don't over-pad small batches
    b_pad = -(-B // bb) * bb

    if b_pad != B:
        x = jnp.pad(x, ((0, b_pad - B), (0, 0), (0, 0)))
    lens2d = jnp.zeros((b_pad, 1), jnp.int32).at[:B, 0].set(jnp.asarray(lens, jnp.int32))

    # NOTE: one block holds the full sequence axis (softmax needs the whole row).
    # For very long S an online-softmax accumulator over an extra "arbitrary"
    # S-grid axis would bound VMEM; not needed at these shapes.
    out = pl.pallas_call(
        masked_attention_kernel,
        out_shape=jax.ShapeDtypeStruct((b_pad, S), jnp.float32),
        grid=(b_pad // bb,),
        in_specs=[
            pl.BlockSpec((bb, S, C), lambda i: (i, 0, 0)),    # x: streamed per batch tile
            pl.BlockSpec((1, C), lambda i: (0, 0)),           # fused weight: resident
            pl.BlockSpec((1, 1), lambda i: (0, 0)),           # fused bias: resident
            pl.BlockSpec((bb, 1), lambda i: (i, 0)),          # lens per batch tile
        ],
        out_specs=pl.BlockSpec((bb, S), lambda i: (i, 0)),
        compiler_params=pltpu.CompilerParams(
            dimension_semantics=("parallel",),                # shard batch across TCs (v7x)
            vmem_limit_bytes=32 * 1024 * 1024,                # v7x-safe scoped VMEM budget
        ),
    )(x, w_comb, b_comb, lens2d)
    return out[:B]


def masked_attention_ref(x, lens, w_omega_w, w_omega_b, u_omega_w, u_omega_b):
    # Unfused reference matching the PyTorch module exactly.
    t = jnp.einsum("bsc,ac->bsa", x, w_omega_w) + w_omega_b
    vu = jnp.einsum("bsa,oa->bso", t, u_omega_w)[..., 0] + u_omega_b[0]
    ids = jnp.arange(vu.shape[-1])[None, :]
    vu = jnp.where(ids < lens[:, None], vu, -jnp.inf)
    return jax.nn.softmax(vu, axis=-1)


if __name__ == "__main__":
    B, S = 2, 8          # batch, sequence length
    code_num = 32        # input feature dim of w_omega
    attention_dim = 16   # hidden dim of attention

    key = jax.random.PRNGKey(0)
    kx, kw1, kb1, kw2, kb2 = jax.random.split(key, 5)

    x = jax.random.normal(kx, (B, S, code_num), dtype=jnp.float32)
    lens = jnp.array([5, 8], dtype=jnp.int32)

    # Deterministic init mirroring nn.Linear's uniform(-1/sqrt(fan_in), +1/sqrt(fan_in))
    b1 = 1.0 / jnp.sqrt(code_num)
    w_omega_w = jax.random.uniform(kw1, (attention_dim, code_num), jnp.float32, -b1, b1)
    w_omega_b = jax.random.uniform(kb1, (attention_dim,), jnp.float32, -b1, b1)
    b2 = 1.0 / jnp.sqrt(attention_dim)
    u_omega_w = jax.random.uniform(kw2, (1, attention_dim), jnp.float32, -b2, b2)
    u_omega_b = jax.random.uniform(kb2, (1,), jnp.float32, -b2, b2)

    out = masked_attention(x, lens, w_omega_w, w_omega_b, u_omega_w, u_omega_b)
    out = jax.block_until_ready(out)

    ref = masked_attention_ref(x, lens, w_omega_w, w_omega_b, u_omega_w, u_omega_b)
    assert out.shape == (B, S)
    assert jnp.allclose(out, ref, atol=1e-5, rtol=1e-4), (out, ref)

    print("KERNEL_OK")
</pallas_src>

<mosaic_0001>
module attributes {stable_mosaic.version = 11 : i64} {
  func.func @masked_attention_kernel(%arg0: i32, %arg1: memref<8x8x32xf32, #tpu.memory_space<vmem>>, %arg2: memref<1x32xf32, #tpu.memory_space<vmem>>, %arg3: memref<1x1xf32, #tpu.memory_space<vmem>>, %arg4: memref<8x1xi32, #tpu.memory_space<vmem>>, %arg5: memref<8x8xf32, #tpu.memory_space<vmem>>) attributes {dimension_semantics = [#tpu.dimension_semantics<parallel>], iteration_bounds = array<i64: 1>, scalar_prefetch = 0 : i64, scratch_operands = 0 : i64, tpu.core_type = #tpu.core_type<tc>, window_params = [{transform_indices = @transform_0, window_bounds = array<i64: 8, 8, 32>}, {pipeline_mode = #tpu.pipeline_mode<synchronous>, transform_indices = @transform_1, window_bounds = array<i64: 1, 32>}, {pipeline_mode = #tpu.pipeline_mode<synchronous>, transform_indices = @transform_2, window_bounds = array<i64: 1, 1>}, {transform_indices = @transform_3, window_bounds = array<i64: 8, 1>}, {transform_indices = @transform_4, window_bounds = array<i64: 8, 8>}]} {
    %c0 = arith.constant 0 : index
    %c0_0 = arith.constant 0 : index
    %c0_1 = arith.constant 0 : index
    %0 = vector.load %arg1[%c0, %c0_0, %c0_1] : memref<8x8x32xf32, #tpu.memory_space<vmem>>, vector<8x8x32xf32>
    %c0_2 = arith.constant 0 : index
    %c0_3 = arith.constant 0 : index
    %1 = vector.load %arg2[%c0_2, %c0_3] : memref<1x32xf32, #tpu.memory_space<vmem>>, vector<1x32xf32>
    %2 = vector.shape_cast %1 : vector<1x32xf32> to vector<1x1x32xf32>
    %3 = vector.broadcast %2 : vector<1x1x32xf32> to vector<8x8x32xf32>
    %4 = arith.mulf %0, %3 : vector<8x8x32xf32>
    %cst = arith.constant dense<0.000000e+00> : vector<8x8xf32>
    %5 = vector.multi_reduction <add>, %4, %cst [2] : vector<8x8x32xf32> to vector<8x8xf32>
    %c0_4 = arith.constant 0 : index
    %c0_5 = arith.constant 0 : index
    %6 = vector.load %arg3[%c0_4, %c0_5] : memref<1x1xf32, #tpu.memory_space<vmem>>, vector<1x1xf32>
    %7 = vector.broadcast %6 : vector<1x1xf32> to vector<8x8xf32>
    %8 = arith.addf %5, %7 : vector<8x8xf32>
    %c0_6 = arith.constant 0 : index
    %c0_7 = arith.constant 0 : index
    %9 = vector.load %arg4[%c0_6, %c0_7] : memref<8x1xi32, #tpu.memory_space<vmem>>, vector<8x1xi32>
    %10 = tpu.iota {dimensions = array<i32: 1>} : vector<8x8xi32>
    %11 = vector.broadcast %9 : vector<8x1xi32> to vector<8x8xi32>
    %12 = arith.cmpi slt, %10, %11 : vector<8x8xi32>
    %cst_8 = arith.constant -1.000000e+30 : f32
    %13 = vector.broadcast %cst_8 : f32 to vector<8x8xf32>
    %14 = arith.select %12, %8, %13 : vector<8x8xi1>, vector<8x8xf32>
    %cst_9 = arith.constant dense<0xFF800000> : vector<8xf32>
    %15 = vector.multi_reduction <maximumf>, %14, %cst_9 [1] : vector<8x8xf32> to vector<8xf32>
    %16 = vector.shape_cast %15 : vector<8xf32> to vector<8x1xf32>
    %17 = vector.broadcast %16 : vector<8x1xf32> to vector<8x8xf32>
    %18 = arith.subf %14, %17 : vector<8x8xf32>
    %19 = math.exp %18 : vector<8x8xf32>
    %cst_10 = arith.constant dense<0.000000e+00> : vector<8xf32>
    %20 = vector.multi_reduction <add>, %19, %cst_10 [1] : vector<8x8xf32> to vector<8xf32>
    %21 = vector.shape_cast %20 : vector<8xf32> to vector<8x1xf32>
    %22 = vector.broadcast %21 : vector<8x1xf32> to vector<8x8xf32>
    %23 = arith.divf %19, %22 : vector<8x8xf32>
    %c0_11 = arith.constant 0 : index
    %c0_12 = arith.constant 0 : index
    %24 = vector.load %arg5[%c0_11, %c0_12] : memref<8x8xf32, #tpu.memory_space<vmem>>, vector<8x8xf32>
    tpu.vector_store %arg5[%c0_11, %c0_12], %23 {strides = array<i32>} : memref<8x8xf32, #tpu.memory_space<vmem>>, vector<8x8xf32>,
    return
  }
  func.func @transform_0(%arg0: i32) -> (i32, i32, i32) {
    %c0_i32 = arith.constant 0 : i32
    %c0_i32_0 = arith.constant 0 : i32
    %c0_i32_1 = arith.constant 0 : i32
    return %arg0, %c0_i32, %c0_i32_0 : i32, i32, i32
  }
  func.func @transform_1(%arg0: i32) -> (i32, i32) {
    %c0_i32 = arith.constant 0 : i32
    %c0_i32_0 = arith.constant 0 : i32
    %c0_i32_1 = arith.constant 0 : i32
    return %c0_i32, %c0_i32_0 : i32, i32
  }
  func.func @transform_2(%arg0: i32) -> (i32, i32) {
    %c0_i32 = arith.constant 0 : i32
    %c0_i32_0 = arith.constant 0 : i32
    %c0_i32_1 = arith.constant 0 : i32
    return %c0_i32, %c0_i32_0 : i32, i32
  }
  func.func @transform_3(%arg0: i32) -> (i32, i32) {
    %c0_i32 = arith.constant 0 : i32
    %c0_i32_0 = arith.constant 0 : i32
    return %arg0, %c0_i32 : i32, i32
  }
  func.func @transform_4(%arg0: i32) -> (i32, i32) {
    %c0_i32 = arith.constant 0 : i32
    %c0_i32_0 = arith.constant 0 : i32
    return %arg0, %c0_i32 : i32, i32
  }
}

</mosaic_0001>

<llo_original>
// kernel: tpu_custom_call.1
$region0: #{tpu_custom_call.1}
  #allocation0 [shape = 'u32[]', space=smem, size = 0x4, offset = 0x4, fixed_abs, tag = 'smem constant byte address 0x4 - core index']
  #allocation1 [shape = 'u32[144,128]{1,0:T(1,128)}', space=vmem, size = 0x12000, scoped, tag = 'internal scratch']
  #allocation2 [shape = 'f32[1,1]{1,0:T(1,128)S(1)}', space=vmem, size = 0x200, scoped, tag = 'scoped memory for tpu_custom_call.1']
  %s0 = inlined_call_operand.hbm [shape: f32[8,8,32], index: 0, kind: input, shape index: {}]
  %s1 = inlined_call_operand.vmem [shape: f32[1,32], index: 1, kind: input, shape index: {}]
  %s2 = inlined_call_operand.<no memory space> [shape: f32[1,1], index: 2, kind: input, shape index: {}]
  %s3 = inlined_call_operand.vmem [shape: s32[8,1], index: 3, kind: input, shape index: {}]
  %s4 = inlined_call_operand.hbm [shape: f32[8,8], index: 4, kind: output, shape index: {}]
  %s5 = sld [smem:[#allocation0]]
  $region30: #{tpu_custom_call.1} parent=0
    _
  %s7 = ssub.s32 1, %s5
  %s8 = scalar_select 0, %s7, %s5
  %v9 = vstv %s2
  %10 = vst [vmem:[#allocation2] sm:$0x1] %v9
  $region1: #{tpu_custom_call.1} parent=0
    #allocation3 [shape = 'u8[32768]{0}', space=vmem, size = 0x8000, scoped, tag = 'input window, operand 0, single buffered']
    #allocation4 [shape = 's32[1]{0}', space=sflag, size = 0x4, scoped, tag = 'scoped memory for tpu_custom_call.1']
    #allocation5 [shape = 's32[1]{0}', space=sflag, size = 0x4, scoped, tag = 'scoped memory for tpu_custom_call.1']
    #allocation6 [shape = 'u8[4096]{0}', space=vmem, size = 0x1000, scoped, tag = 'output window, operand 0, single buffered']
    %11 = vsyncpa [#allocation4], 0
    %12 = vsyncpa [#allocation5], 0
    // Predicated region
    $region2: #{tpu_custom_call.1} parent=1 // pred_check
      _
    $region3: #{tpu_custom_call.1} parent=1 // pred_check_branch
      %14 = sbr.rel (0) target = $region5
    $region4: #{tpu_custom_call.1} parent=1 // pred_region
      %s16 = ssub.s32 1024, 1024
      %17 = vsyncadd [#allocation4], %s16
      %s18 = sshll.u32 [#allocation3], 4
      %s19 = int_to_ptr.vmem [resolvable:$true] %s18
      %24 = dma.hbm_to_vmem [thread:$0]  %s0, 1024, %s19, [#allocation4], 128, 128, 8
    $region5: #{tpu_custom_call.1} parent=1 // pred_fallthru
      _
    // Predicated region
    $region6: #{tpu_custom_call.1} parent=1 // pred_check
      _
    $region7: #{tpu_custom_call.1} parent=1 // pred_check_branch
      %26 = sbr.rel (0) target = $region9
    $region8: #{tpu_custom_call.1} parent=1 // pred_region
      _
    $region9: #{tpu_custom_call.1} parent=1 // pred_fallthru
      _
    // Predicated region
    $region10: #{tpu_custom_call.1} parent=1 // pred_check
      _
    $region11: #{tpu_custom_call.1} parent=1 // pred_check_branch
      %28 = sbr.rel (0) target = $region13
    $region12: #{tpu_custom_call.1} parent=1 // pred_region
      _
    $region13: #{tpu_custom_call.1} parent=1 // pred_fallthru
      _
    // Predicated region
    $region14: #{tpu_custom_call.1} parent=1 // pred_check
      _
    $region15: #{tpu_custom_call.1} parent=1 // pred_check_branch
      %30 = sbr.rel (0) target = $region17
    $region16: #{tpu_custom_call.1} parent=1 // pred_region
      _
    $region17: #{tpu_custom_call.1} parent=1 // pred_fallthru
      _
    // Predicated region
    $region18: #{tpu_custom_call.1} parent=1 // pred_check
      _
    $region19: #{tpu_custom_call.1} parent=1 // pred_check_branch
      %32 = sbr.rel (0) target = $region21
    $region20: #{tpu_custom_call.1} parent=1 // pred_region
      %33 = dma.done [#allocation4], 1024
    $region21: #{tpu_custom_call.1} parent=1 // pred_fallthru
      _
    %v34 = vld [vmem:[#allocation3] sm:$0xff]
    %v35 = vld [vmem:[#allocation3 + $0x8] sm:$0xff]
    %v36 = vld [vmem:[#allocation3 + $0x10] sm:$0xff]
    %v37 = vld [vmem:[#allocation3 + $0x18] sm:$0xff]
    %v38 = vld [vmem:[#allocation3 + $0x20] sm:$0xff]
    %v39 = vld [vmem:[#allocation3 + $0x28] sm:$0xff]
    %v40 = vld [vmem:[#allocation3 + $0x30] sm:$0xff]
    %v41 = vld [vmem:[#allocation3 + $0x38] sm:$0xff]
    %v42 = vld [vmem:[%s1] sm:$0x1]
    %v44 = vlaneseq
    %v45 = vshrl.u32 %v44, 7
    %v46 = vsub.s32 0, %v45
    %v47 = vrot.slane %v42, %v46
    %v49 = vmul.f32 %v34, %v47
    %v50 = vmul.f32 %v35, %v47
    %v51 = vmul.f32 %v36, %v47
    %v52 = vmul.f32 %v37, %v47
    %v53 = vmul.f32 %v38, %v47
    %v54 = vmul.f32 %v39, %v47
    %v55 = vmul.f32 %v40, %v47
    %v56 = vmul.f32 %v41, %v47
    %vm57 = vcmask 261120
    %v58 = vsel %vm57, %v49, 0.0
    %59 = vadd.xlane.f32.xlu0 %v58
    %v60 = vpop.xlane.xlu0 %59
    %v61 = vsel %vm57, %v50, 0.0
    %62 = vadd.xlane.f32.xlu0 %v61
    %v63 = vpop.xlane.xlu0 %62
    %v64 = vsel %vm57, %v51, 0.0
    %65 = vadd.xlane.f32.xlu0 %v64
    %v66 = vpop.xlane.xlu0 %65
    %v67 = vsel %vm57, %v52, 0.0
    %68 = vadd.xlane.f32.xlu0 %v67
    %v69 = vpop.xlane.xlu0 %68
    %v70 = vsel %vm57, %v53, 0.0
    %71 = vadd.xlane.f32.xlu0 %v70
    %v72 = vpop.xlane.xlu0 %71
    %v73 = vsel %vm57, %v54, 0.0
    %74 = vadd.xlane.f32.xlu0 %v73
    %v75 = vpop.xlane.xlu0 %74
    %v76 = vsel %vm57, %v55, 0.0
    %77 = vadd.xlane.f32.xlu0 %v76
    %v78 = vpop.xlane.xlu0 %77
    %v79 = vsel %vm57, %v56, 0.0
    %80 = vadd.xlane.f32.xlu0 %v79
    %v81 = vpop.xlane.xlu0 %80
    %v82 = vld [vmem:[#allocation2] sm:$0x1]
    %v84 = vlaneseq
    %v85 = vshrl.u32 %v84, 7
    %v86 = vsub.s32 0, %v85
    %v87 = vrot.slane %v82, %v86
    %88 = vset.pattern.permute.xlu0 0
    %89 = vperm.xlu0 %88, %v87
    %v90 = vpop.permute.xlu0 %89
    %v92 = vadd.f32 %v60, %v90
    %v93 = vadd.f32 %v63, %v90
    %v94 = vadd.f32 %v66, %v90
    %v95 = vadd.f32 %v69, %v90
    %v96 = vadd.f32 %v72, %v90
    %v97 = vadd.f32 %v75, %v90
    %v98 = vadd.f32 %v78, %v90
    %v99 = vadd.f32 %v81, %v90
    %v100 = vld [vmem:[%s3] sm:$0xff]
    %v101 = vlaneseq
    %v102 = vand.u32 %v101, 127
    %103 = vset.pattern.permute.xlu0 0
    %104 = vperm.xlu0 %103, %v100
    %v105 = vpop.permute.xlu0 %104
    %vm106 = vcmp.lt.s32.totalorder %v102, %v105
    %v115 = vlaneseq
    %v116 = vshrl.u32 %v115, 7
    %v117 = vsub.s32 %v102, %v116
    %v118 = vrot.slane %v92, %v117
    %v119 = vlaneseq
    %v120 = vshrl.u32 %v119, 7
    %v121 = vsub.s32 %v102, %v120
    %v122 = vrot.slane %v93, %v121
    %v123 = vlaneseq
    %v124 = vshrl.u32 %v123, 7
    %v125 = vsub.s32 %v102, %v124
    %v126 = vrot.slane %v94, %v125
    %v127 = vlaneseq
    %v128 = vshrl.u32 %v127, 7
    %v129 = vsub.s32 %v102, %v128
    %v130 = vrot.slane %v95, %v129
    %v131 = vlaneseq
    %v132 = vshrl.u32 %v131, 7
    %v133 = vsub.s32 %v102, %v132
    %v134 = vrot.slane %v96, %v133
    %v135 = vlaneseq
    %v136 = vshrl.u32 %v135, 7
    %v137 = vsub.s32 %v102, %v136
    %v138 = vrot.slane %v97, %v137
    %v139 = vlaneseq
    %v140 = vshrl.u32 %v139, 7
    %v141 = vsub.s32 %v102, %v140
    %v142 = vrot.slane %v98, %v141
    %v143 = vlaneseq
    %v144 = vshrl.u32 %v143, 7
    %v145 = vsub.s32 %v102, %v144
    %v146 = vrot.slane %v99, %v145
    %vm147 = vcmask 1041409
    %v148 = vsel %vm147, %v122, %v118
    %vm149 = vcmask 1042434
    %v150 = vsel %vm149, %v126, %v148
    %vm151 = vcmask 1043459
    %v152 = vsel %vm151, %v130, %v150
    %vm153 = vcmask 1044484
    %v154 = vsel %vm153, %v134, %v152
    %vm155 = vcmask 1045509
    %v156 = vsel %vm155, %v138, %v154
    %vm157 = vcmask 1046534
    %v158 = vsel %vm157, %v142, %v156
    %vm159 = vcmask 1047559
    %v160 = vsel %vm159, %v146, %v158
    %v162 = vsel %vm106, %v160, -1e+30
    %vm163 = vcmask 64512
    %v164 = vsel %vm163, %v162, -inf
    %165 = vmax.xlane.f32.xlu0 %v164
    %v166 = vpop.xlane.xlu0 %165
    %v167 = vsub.f32 %v162, %v166
    %v168 = vmul.f32 %v167, 1.442695
    %v169 = vpow.pop %v168
    %v170 = vsel %vm163, %v169, 0.0
    %171 = vadd.xlane.f32.xlu0 %v170
    %v172 = vpop.xlane.xlu0 %171
    %v173 = vrcp.pop %v172
    %v174 = vmul.f32 %v169, %v173
    %175 = vst.msk [vmem:[#allocation6] sm:$0xff] %vm163, %v174
    // Predicated region
    $region22: #{tpu_custom_call.1} parent=1 // pred_check
      _
    $region23: #{tpu_custom_call.1} parent=1 // pred_check_branch
      %177 = sbr.rel (0) target = $region25
    $region24: #{tpu_custom_call.1} parent=1 // pred_region
      %s179 = ssub.s32 128, 128
      %180 = vsyncadd [#allocation5], %s179
      %s182 = sshll.u32 [#allocation6], 4
      %s183 = int_to_ptr.vmem [resolvable:$true] %s182
      %185 = dma.vmem_to_hbm [thread:$0]  %s183, 128, %s4, [#allocation5]
    $region25: #{tpu_custom_call.1} parent=1 // pred_fallthru
      _
    // Predicated region
    $region26: #{tpu_custom_call.1} parent=1 // pred_check
      _
    $region27: #{tpu_custom_call.1} parent=1 // pred_check_branch
      %187 = sbr.rel (0) target = $region29
    $region28: #{tpu_custom_call.1} parent=1 // pred_region
      %188 = dma.done [#allocation5], 128
    $region29: #{tpu_custom_call.1} parent=1 // pred_fallthru
      _
    %189 = vsyncpa [#allocation4], 1
    %190 = vsyncpa [#allocation5], 1

</llo_original>
